<compile_context>
chip_gen: v7x
topology: tpu7x:2x2x1
jax: 0.10.0
libtpu: 0.0.40
codegen_flags: <defaults>
</compile_context>

<pallas_src>
import jax
import jax.numpy as jnp
from jax.experimental import pallas as pl
from jax.experimental.pallas import tpu as pltpu


def _round_up(x: int, m: int) -> int:
    return ((x + m - 1) // m) * m


def mlp_log_softmax_kernel(x_ref, w1_ref, b1_ref, w2_ref, b2_ref, o_ref):
    # fc1 + ReLU (MXU matmul, f32 accumulation). Hidden dim is lane-padded
    # to 128 in the wrapper (zero weight / zero bias pads -> ReLU keeps 0).
    h = jnp.dot(x_ref[...], w1_ref[...], preferred_element_type=jnp.float32)
    h = jnp.maximum(h + b1_ref[...], 0.0)

    # fc2: output dim lane-padded to 128; padded columns carry bias -1e30.
    logits = jnp.dot(h, w2_ref[...], preferred_element_type=jnp.float32)
    logits = logits + b2_ref[...]

    # Numerically stable log_softmax over the padded 128 lanes.  Padded lanes
    # sit at ~-1e30: they never win the max and exp(shifted) underflows to 0,
    # so lanes [:10] match log_softmax over the real 10 classes exactly.
    m = jnp.max(logits, axis=1, keepdims=True)
    shifted = logits - m
    lse = jnp.log(jnp.sum(jnp.exp(shifted), axis=1, keepdims=True))
    o_ref[...] = (shifted - lse).astype(o_ref.dtype)


def net_forward(x, w1, b1, w2, b2, *, block_b: int = 512):
    """x: [B, 100] f32; w1: [100, 50]; b1: [50]; w2: [50, 10]; b2: [10]."""
    B, d_in = x.shape
    d_hid = w1.shape[1]
    d_out = w2.shape[1]

    # --- lane-dense padding of feature dims (one-time, tiny) ---------------
    hid_pad = _round_up(d_hid, 128)
    out_pad = _round_up(d_out, 128)
    w1p = jnp.pad(w1, ((0, 0), (0, hid_pad - d_hid)))
    b1p = jnp.pad(jnp.reshape(b1, (1, -1)), ((0, 0), (0, hid_pad - d_hid)))
    w2p = jnp.pad(w2, ((0, hid_pad - d_hid), (0, out_pad - d_out)))
    b2p = jnp.pad(jnp.reshape(b2, (1, -1)), ((0, 0), (0, out_pad - d_out)),
                  constant_values=-1e30)

    # --- batch tiling --------------------------------------------------------
    # TM sized well under v7x's 32 MiB scoped-VMEM default even double-buffered
    # (TM=512: ~2*512*(100+128)*4 B < 1 MiB + ~120 KiB resident weights).
    TM = int(min(block_b, _round_up(B, 8)))
    B_pad = _round_up(B, TM)
    xp = jnp.pad(x, ((0, B_pad - B), (0, 0))) if B_pad != B else x
    grid = (pl.cdiv(B_pad, TM),)

    out_padded = pl.pallas_call(
        mlp_log_softmax_kernel,
        out_shape=jax.ShapeDtypeStruct((B_pad, out_pad), jnp.float32),
        grid_spec=pl.GridSpec(
            grid=grid,
            in_specs=[
                pl.BlockSpec((TM, d_in), lambda i: (i, 0)),        # x: streamed
                pl.BlockSpec((d_in, hid_pad), lambda i: (0, 0)),   # w1: resident
                pl.BlockSpec((1, hid_pad), lambda i: (0, 0)),      # b1: resident
                pl.BlockSpec((hid_pad, out_pad), lambda i: (0, 0)),# w2: resident
                pl.BlockSpec((1, out_pad), lambda i: (0, 0)),      # b2: resident
            ],
            out_specs=pl.BlockSpec((TM, out_pad), lambda i: (i, 0)),
        ),
        compiler_params=pltpu.CompilerParams(
            dimension_semantics=("parallel",),
        ),
    )(xp, w1p, b1p, w2p, b2p)

    # Strip batch padding and padded output lanes.
    return out_padded[:B, :d_out]


def reference_forward(x, w1, b1, w2, b2):
    h = jnp.maximum(x @ w1 + b1, 0.0)
    logits = h @ w2 + b2
    return jax.nn.log_softmax(logits, axis=1)


if __name__ == "__main__":
    key = jax.random.PRNGKey(0)
    kx, k1, k2, k3, k4, kx2 = jax.random.split(key, 6)

    D_IN, D_HID, D_OUT = 100, 50, 10

    # Deterministic PyTorch-like uniform fan-in init.
    lim1 = 1.0 / (D_IN ** 0.5)
    lim2 = 1.0 / (D_HID ** 0.5)
    w1 = jax.random.uniform(k1, (D_IN, D_HID), jnp.float32, -lim1, lim1)
    b1 = jax.random.uniform(k2, (D_HID,), jnp.float32, -lim1, lim1)
    w2 = jax.random.uniform(k3, (D_HID, D_OUT), jnp.float32, -lim2, lim2)
    b2 = jax.random.uniform(k4, (D_OUT,), jnp.float32, -lim2, lim2)

    # Small batch (matches the module's usage).
    B1 = 8
    x1 = jax.random.normal(kx, (B1, D_IN), dtype=jnp.float32)
    out1 = net_forward(x1, w1, b1, w2, b2)
    jax.block_until_ready(out1)
    ref1 = reference_forward(x1, w1, b1, w2, b2)
    assert out1.shape == (B1, D_OUT)
    assert jnp.allclose(out1, ref1, atol=1e-5, rtol=1e-5), "mismatch (B=8)"

    # Multi-tile path: non-multiple batch + small block to exercise the grid,
    # batch padding, resident weights, and lane-dense output store.
    B2 = 300
    x2 = jax.random.normal(kx2, (B2, D_IN), dtype=jnp.float32)
    out2 = net_forward(x2, w1, b1, w2, b2, block_b=128)
    jax.block_until_ready(out2)
    ref2 = reference_forward(x2, w1, b1, w2, b2)
    assert out2.shape == (B2, D_OUT)
    assert jnp.allclose(out2, ref2, atol=1e-5, rtol=1e-5), "mismatch (B=300)"

    print("KERNEL_OK")
</pallas_src>

<mosaic_0001>
module attributes {stable_mosaic.version = 11 : i64} {
  func.func @mlp_log_softmax_kernel(%arg0: i32, %arg1: memref<8x100xf32, #tpu.memory_space<vmem>>, %arg2: memref<100x128xf32, #tpu.memory_space<vmem>>, %arg3: memref<1x128xf32, #tpu.memory_space<vmem>>, %arg4: memref<128x128xf32, #tpu.memory_space<vmem>>, %arg5: memref<1x128xf32, #tpu.memory_space<vmem>>, %arg6: memref<8x128xf32, #tpu.memory_space<vmem>>) attributes {dimension_semantics = [#tpu.dimension_semantics<parallel>], iteration_bounds = array<i64: 1>, scalar_prefetch = 0 : i64, scratch_operands = 0 : i64, tpu.core_type = #tpu.core_type<tc>, window_params = [{transform_indices = @transform_0, window_bounds = array<i64: 8, 100>}, {pipeline_mode = #tpu.pipeline_mode<synchronous>, transform_indices = @transform_1, window_bounds = array<i64: 100, 128>}, {pipeline_mode = #tpu.pipeline_mode<synchronous>, transform_indices = @transform_2, window_bounds = array<i64: 1, 128>}, {pipeline_mode = #tpu.pipeline_mode<synchronous>, transform_indices = @transform_3, window_bounds = array<i64: 128, 128>}, {pipeline_mode = #tpu.pipeline_mode<synchronous>, transform_indices = @transform_4, window_bounds = array<i64: 1, 128>}, {transform_indices = @transform_5, window_bounds = array<i64: 8, 128>}]} {
    %c0 = arith.constant 0 : index
    %c0_0 = arith.constant 0 : index
    %0 = vector.load %arg1[%c0, %c0_0] : memref<8x100xf32, #tpu.memory_space<vmem>>, vector<8x100xf32>
    %c0_1 = arith.constant 0 : index
    %c0_2 = arith.constant 0 : index
    %1 = vector.load %arg2[%c0_1, %c0_2] : memref<100x128xf32, #tpu.memory_space<vmem>>, vector<100x128xf32>
    %cst = arith.constant dense<0.000000e+00> : vector<8x128xf32>
    %2 = tpu.matmul %0, %1, %cst {dimension_numbers = #tpu.dot_dimension_numbers<[1], [0], [0], [1], [0, 0, 1, 1], [], []>} : vector<8x100xf32>, vector<100x128xf32>, vector<8x128xf32> -> vector<8x128xf32>
    %c0_3 = arith.constant 0 : index
    %c0_4 = arith.constant 0 : index
    %3 = vector.load %arg3[%c0_3, %c0_4] : memref<1x128xf32, #tpu.memory_space<vmem>>, vector<1x128xf32>
    %4 = vector.broadcast %3 : vector<1x128xf32> to vector<8x128xf32>
    %5 = arith.addf %2, %4 : vector<8x128xf32>
    %cst_5 = arith.constant 0.000000e+00 : f32
    %6 = vector.broadcast %cst_5 : f32 to vector<8x128xf32>
    %7 = arith.maximumf %5, %6 : vector<8x128xf32>
    %c0_6 = arith.constant 0 : index
    %c0_7 = arith.constant 0 : index
    %8 = vector.load %arg4[%c0_6, %c0_7] : memref<128x128xf32, #tpu.memory_space<vmem>>, vector<128x128xf32>
    %cst_8 = arith.constant dense<0.000000e+00> : vector<8x128xf32>
    %9 = tpu.matmul %7, %8, %cst_8 {dimension_numbers = #tpu.dot_dimension_numbers<[1], [0], [0], [1], [0, 0, 1, 1], [], []>} : vector<8x128xf32>, vector<128x128xf32>, vector<8x128xf32> -> vector<8x128xf32>
    %c0_9 = arith.constant 0 : index
    %c0_10 = arith.constant 0 : index
    %10 = vector.load %arg5[%c0_9, %c0_10] : memref<1x128xf32, #tpu.memory_space<vmem>>, vector<1x128xf32>
    %11 = vector.broadcast %10 : vector<1x128xf32> to vector<8x128xf32>
    %12 = arith.addf %9, %11 : vector<8x128xf32>
    %cst_11 = arith.constant dense<0xFF800000> : vector<8xf32>
    %13 = vector.multi_reduction <maximumf>, %12, %cst_11 [1] : vector<8x128xf32> to vector<8xf32>
    %14 = vector.shape_cast %13 : vector<8xf32> to vector<8x1xf32>
    %15 = vector.broadcast %14 : vector<8x1xf32> to vector<8x128xf32>
    %16 = arith.subf %12, %15 : vector<8x128xf32>
    %17 = math.exp %16 : vector<8x128xf32>
    %cst_12 = arith.constant dense<0.000000e+00> : vector<8xf32>
    %18 = vector.multi_reduction <add>, %17, %cst_12 [1] : vector<8x128xf32> to vector<8xf32>
    %19 = vector.shape_cast %18 : vector<8xf32> to vector<8x1xf32>
    %20 = math.log %19 : vector<8x1xf32>
    %21 = vector.broadcast %20 : vector<8x1xf32> to vector<8x128xf32>
    %22 = arith.subf %16, %21 : vector<8x128xf32>
    %c0_13 = arith.constant 0 : index
    %c0_14 = arith.constant 0 : index
    %23 = vector.load %arg6[%c0_13, %c0_14] : memref<8x128xf32, #tpu.memory_space<vmem>>, vector<8x128xf32>
    tpu.vector_store %arg6[%c0_13, %c0_14], %22 {strides = array<i32>} : memref<8x128xf32, #tpu.memory_space<vmem>>, vector<8x128xf32>,
    return
  }
  func.func @transform_0(%arg0: i32) -> (i32, i32) {
    %c0_i32 = arith.constant 0 : i32
    %c0_i32_0 = arith.constant 0 : i32
    return %arg0, %c0_i32 : i32, i32
  }
  func.func @transform_1(%arg0: i32) -> (i32, i32) {
    %c0_i32 = arith.constant 0 : i32
    %c0_i32_0 = arith.constant 0 : i32
    %c0_i32_1 = arith.constant 0 : i32
    return %c0_i32, %c0_i32_0 : i32, i32
  }
  func.func @transform_2(%arg0: i32) -> (i32, i32) {
    %c0_i32 = arith.constant 0 : i32
    %c0_i32_0 = arith.constant 0 : i32
    %c0_i32_1 = arith.constant 0 : i32
    return %c0_i32, %c0_i32_0 : i32, i32
  }
  func.func @transform_3(%arg0: i32) -> (i32, i32) {
    %c0_i32 = arith.constant 0 : i32
    %c0_i32_0 = arith.constant 0 : i32
    %c0_i32_1 = arith.constant 0 : i32
    return %c0_i32, %c0_i32_0 : i32, i32
  }
  func.func @transform_4(%arg0: i32) -> (i32, i32) {
    %c0_i32 = arith.constant 0 : i32
    %c0_i32_0 = arith.constant 0 : i32
    %c0_i32_1 = arith.constant 0 : i32
    return %c0_i32, %c0_i32_0 : i32, i32
  }
  func.func @transform_5(%arg0: i32) -> (i32, i32) {
    %c0_i32 = arith.constant 0 : i32
    %c0_i32_0 = arith.constant 0 : i32
    return %arg0, %c0_i32 : i32, i32
  }
}

</mosaic_0001>

<llo_original>
// kernel: tpu_custom_call.1
$region0: #{tpu_custom_call.1}
  #allocation0 [shape = 'u32[]', space=smem, size = 0x4, offset = 0x4, fixed_abs, tag = 'smem constant byte address 0x4 - core index']
  #allocation1 [shape = 'u32[144,128]{1,0:T(1,128)}', space=vmem, size = 0x12000, scoped, tag = 'internal scratch']
  %s0 = inlined_call_operand.hbm [shape: f32[8,100], index: 0, kind: input, shape index: {}]
  %s1 = inlined_call_operand.hbm [shape: f32[100,128], index: 1, kind: input, shape index: {}]
  %s2 = inlined_call_operand.vmem [shape: f32[1,128], index: 2, kind: input, shape index: {}]
  %s3 = inlined_call_operand.hbm [shape: f32[128,128], index: 3, kind: input, shape index: {}]
  %s4 = inlined_call_operand.vmem [shape: f32[1,128], index: 4, kind: input, shape index: {}]
  %s5 = inlined_call_operand.hbm [shape: f32[8,128], index: 5, kind: output, shape index: {}]
  %s6 = sld [smem:[#allocation0]]
  $region42: #{tpu_custom_call.1} parent=0
    _
  %s8 = ssub.s32 1, %s6
  %s9 = scalar_select 0, %s8, %s6
  $region1: #{tpu_custom_call.1} parent=0
    #allocation2 [shape = 'u8[4096]{0}', space=vmem, size = 0x1000, scoped, tag = 'input window, operand 0, single buffered']
    #allocation3 [shape = 's32[1]{0}', space=sflag, size = 0x4, scoped, tag = 'scoped memory for tpu_custom_call.1']
    #allocation4 [shape = 's32[1]{0}', space=sflag, size = 0x4, scoped, tag = 'scoped memory for tpu_custom_call.1']
    #allocation5 [shape = 'u8[53248]{0}', space=vmem, size = 0xd000, scoped, tag = 'input window, operand 1, single buffered']
    #allocation6 [shape = 's32[1]{0}', space=sflag, size = 0x4, scoped, tag = 'scoped memory for tpu_custom_call.1']
    #allocation7 [shape = 'u8[65536]{0}', space=vmem, size = 0x10000, scoped, tag = 'input window, operand 3, single buffered']
    #allocation8 [shape = 'u8[4096]{0}', space=vmem, size = 0x1000, scoped, tag = 'output window, operand 0, single buffered']
    %10 = vsyncpa [#allocation3], 0
    %11 = vsyncpa [#allocation6], 0
    %12 = vsyncpa [#allocation4], 0
    // Predicated region
    $region2: #{tpu_custom_call.1} parent=1 // pred_check
      _
    $region3: #{tpu_custom_call.1} parent=1 // pred_check_branch
      %14 = sbr.rel (0) target = $region5
    $region4: #{tpu_custom_call.1} parent=1 // pred_region
      %s16 = ssub.s32 128, 128
      %17 = vsyncadd [#allocation3], %s16
      %s19 = sshll.u32 [#allocation2], 4
      %s20 = int_to_ptr.vmem [resolvable:$true] %s19
      %22 = dma.hbm_to_vmem [thread:$0]  %s0, 128, %s20, [#allocation3]
    $region5: #{tpu_custom_call.1} parent=1 // pred_fallthru
      _
    // Predicated region
    $region6: #{tpu_custom_call.1} parent=1 // pred_check
      _
    $region7: #{tpu_custom_call.1} parent=1 // pred_check_branch
      %24 = sbr.rel (0) target = $region9
    $region8: #{tpu_custom_call.1} parent=1 // pred_region
      %s26 = ssub.s32 1664, 1664
      %27 = vsyncadd [#allocation6], %s26
      %s28 = sshll.u32 [#allocation5], 4
      %s29 = int_to_ptr.vmem [resolvable:$true] %s28
      %34 = dma.hbm_to_vmem [thread:$0]  %s1, 1664, %s29, [#allocation6], 128, 128, 8
    $region9: #{tpu_custom_call.1} parent=1 // pred_fallthru
      _
    // Predicated region
    $region10: #{tpu_custom_call.1} parent=1 // pred_check
      _
    $region11: #{tpu_custom_call.1} parent=1 // pred_check_branch
      %36 = sbr.rel (0) target = $region13
    $region12: #{tpu_custom_call.1} parent=1 // pred_region
      _
    $region13: #{tpu_custom_call.1} parent=1 // pred_fallthru
      _
    // Predicated region
    $region14: #{tpu_custom_call.1} parent=1 // pred_check
      _
    $region15: #{tpu_custom_call.1} parent=1 // pred_check_branch
      %38 = sbr.rel (0) target = $region17
    $region16: #{tpu_custom_call.1} parent=1 // pred_region
      %s40 = ssub.s32 2048, 2048
      %41 = vsyncadd [#allocation6], %s40
      %s42 = sshll.u32 [#allocation7], 4
      %s43 = int_to_ptr.vmem [resolvable:$true] %s42
      %48 = dma.hbm_to_vmem [thread:$0]  %s3, 2048, %s43, [#allocation6], 128, 128, 8
    $region17: #{tpu_custom_call.1} parent=1 // pred_fallthru
      _
    // Predicated region
    $region18: #{tpu_custom_call.1} parent=1 // pred_check
      _
    $region19: #{tpu_custom_call.1} parent=1 // pred_check_branch
      %50 = sbr.rel (0) target = $region21
    $region20: #{tpu_custom_call.1} parent=1 // pred_region
      _
    $region21: #{tpu_custom_call.1} parent=1 // pred_fallthru
      _
    // Predicated region
    $region22: #{tpu_custom_call.1} parent=1 // pred_check
      _
    $region23: #{tpu_custom_call.1} parent=1 // pred_check_branch
      %52 = sbr.rel (0) target = $region25
    $region24: #{tpu_custom_call.1} parent=1 // pred_region
      %53 = dma.done [#allocation3], 128
    $region25: #{tpu_custom_call.1} parent=1 // pred_fallthru
      _
    // Predicated region
    $region26: #{tpu_custom_call.1} parent=1 // pred_check
      _
    $region27: #{tpu_custom_call.1} parent=1 // pred_check_branch
      %55 = sbr.rel (0) target = $region29
    $region28: #{tpu_custom_call.1} parent=1 // pred_region
      %56 = dma.done [#allocation6], 1664
    $region29: #{tpu_custom_call.1} parent=1 // pred_fallthru
      _
    // Predicated region
    $region30: #{tpu_custom_call.1} parent=1 // pred_check
      _
    $region31: #{tpu_custom_call.1} parent=1 // pred_check_branch
      %58 = sbr.rel (0) target = $region33
    $region32: #{tpu_custom_call.1} parent=1 // pred_region
      %59 = dma.done [#allocation6], 2048
    $region33: #{tpu_custom_call.1} parent=1 // pred_fallthru
      _
    %v60 = vld [vmem:[#allocation2] sm:$0xff]
    %v61 = vld [vmem:[#allocation5] sm:$0xff]
    %v62 = vld [vmem:[#allocation5 + $0x8] sm:$0xff]
    %v63 = vld [vmem:[#allocation5 + $0x10] sm:$0xff]
    %v64 = vld [vmem:[#allocation5 + $0x18] sm:$0xff]
    %v65 = vld [vmem:[#allocation5 + $0x20] sm:$0xff]
    %v66 = vld [vmem:[#allocation5 + $0x28] sm:$0xff]
    %v67 = vld [vmem:[#allocation5 + $0x30] sm:$0xff]
    %v68 = vld [vmem:[#allocation5 + $0x38] sm:$0xff]
    %v69 = vld [vmem:[#allocation5 + $0x40] sm:$0xff]
    %v70 = vld [vmem:[#allocation5 + $0x48] sm:$0xff]
    %v71 = vld [vmem:[#allocation5 + $0x50] sm:$0xff]
    %v72 = vld [vmem:[#allocation5 + $0x58] sm:$0xff]
    %v73 = vld [vmem:[#allocation5 + $0x60] sm:$0xf]
    %v74 = vld [vmem:[%s2] sm:$0x1]
    %v76 = vlaneseq
    %v77 = vshrl.u32 %v76, 7
    %v78 = vsub.s32 0, %v77
    %v79 = vrot.slane %v74, %v78
    %vm81 = vcmask 818176
    %v83 = vsel %vm81, %v60, 0
    %vm85 = vcmask 1043456
    %v87 = vsel %vm85, %v73, 0
    %89 = vmatprep.subr.mxu0 0.0
    %90 = vmatpush1.msra.mxu0 %v61
    %91 = vmatprep.subr.mxu0 0.0
    %92 = vmatpush1.msra.mxu0 %v62
    %93 = vmatprep.subr.mxu0 0.0
    %94 = vmatpush1.msra.mxu0 %v63
    %95 = vmatprep.subr.mxu0 0.0
    %96 = vmatpush1.msra.mxu0 %v64
    %97 = vmatprep.subr.mxu0 0.0
    %98 = vmatpush1.msra.mxu0 %v65
    %99 = vmatprep.subr.mxu0 0.0
    %100 = vmatpush1.msra.mxu0 %v66
    %101 = vmatprep.subr.mxu0 0.0
    %102 = vmatpush1.msra.mxu0 %v67
    %103 = vmatprep.subr.mxu0 0.0
    %104 = vmatpush1.msra.mxu0 %v68
    %105 = vmatprep.subr.mxu0 0.0
    %106 = vmatpush1.msra.mxu0 %v69
    %107 = vmatprep.subr.mxu0 0.0
    %108 = vmatpush1.msra.mxu0 %v70
    %109 = vmatprep.subr.mxu0 0.0
    %110 = vmatpush1.msra.mxu0 %v71
    %111 = vmatprep.subr.mxu0 0.0
    %112 = vmatpush1.msra.mxu0 %v72
    %113 = vmatprep.subr.mxu0 0.0
    %114 = vmatpush1.msra.mxu0 %v87
    %115 = vmatprep.subr.mxu0 0.0
    %116 = vmatpush1.msra.mxu0 0.0
    %117 = vmatprep.subr.mxu0 0.0
    %118 = vmatpush1.msra.mxu0 0.0
    %119 = vmatprep.subr.mxu0 0.0
    %120 = vmatpush1.msra.mxu0 0.0
    %121 = vmatprep.subr.mxu0 0.0
    %122 = vmatpush1.msra.mxu0 0.0
    %123 = vmatprep.subr.mxu0 0.0
    %124 = vmatpush1.msra.mxu0 0.0
    %125 = vmatprep.subr.mxu0 0.0
    %126 = vmatpush1.msra.mxu0 0.0
    %127 = vmatprep.subr.mxu0 0.0
    %128 = vmatpush1.msra.mxu0 0.0
    %129 = vmatprep.subr.mxu0 0.0
    %130 = vmatpush1.msra.mxu0 0.0
    %131 = vmatprep.subr.mxu0 0.0
    %132 = vmatpush1.msra.mxu0 0.0
    %133 = vmatprep.subr.mxu0 0.0
    %134 = vmatpush1.msra.mxu0 0.0
    %135 = vmatprep.subr.mxu0 0.0
    %136 = vmatpush1.msra.mxu0 0.0
    %137 = vmatprep.subr.mxu0 0.0
    %138 = vmatpush1.msra.mxu0 0.0
    %139 = vmatprep.subr.mxu0 0.0
    %140 = vmatpush1.msra.mxu0 0.0
    %141 = vmatprep.subr.mxu0 0.0
    %142 = vmatpush1.msra.mxu0 0.0
    %143 = vmatprep.subr.mxu0 0.0
    %144 = vmatpush1.msra.mxu0 0.0
    %145 = vmatprep.subr.mxu0 0.0
    %146 = vmatpush1.msra.mxu0 0.0
    %147 = vmatprep.subr.mxu0 0.0
    %148 = vmatpush1.msra.mxu0 0.0
    %149 = vmatprep.subr.mxu0 0.0
    %150 = vmatpush1.msra.mxu0 0.0
    %151 = vmatprep.subr.mxu0 0.0
    %152 = vmatpush1.msra.mxu0 0.0
    %153 = vmatprep.mubr.f32.mxu0 0.0
    %154 = vmatmul.mubr.f32.gmra.mrb[0].mxu0 %v83
    %v155 = vpop.f32.mrb[0].mxu0
    %v156 = vadd.f32 %v79, %v155
    %v157 = vpop.f32.mrb[0].mxu0
    %158 = vdwg.mxu0
    %v159 = vmax.f32 %v156, 0.0
    %v160 = vld [vmem:[#allocation7] sm:$0xff]
    %v161 = vld [vmem:[#allocation7 + $0x8] sm:$0xff]
    %v162 = vld [vmem:[#allocation7 + $0x10] sm:$0xff]
    %v163 = vld [vmem:[#allocation7 + $0x18] sm:$0xff]
    %v164 = vld [vmem:[#allocation7 + $0x20] sm:$0xff]
    %v165 = vld [vmem:[#allocation7 + $0x28] sm:$0xff]
    %v166 = vld [vmem:[#allocation7 + $0x30] sm:$0xff]
    %v167 = vld [vmem:[#allocation7 + $0x38] sm:$0xff]
    %v168 = vld [vmem:[#allocation7 + $0x40] sm:$0xff]
    %v169 = vld [vmem:[#allocation7 + $0x48] sm:$0xff]
    %v170 = vld [vmem:[#allocation7 + $0x50] sm:$0xff]
    %v171 = vld [vmem:[#allocation7 + $0x58] sm:$0xff]
    %v172 = vld [vmem:[#allocation7 + $0x60] sm:$0xff]
    %v173 = vld [vmem:[#allocation7 + $0x68] sm:$0xff]
    %v174 = vld [vmem:[#allocation7 + $0x70] sm:$0xff]
    %v175 = vld [vmem:[#allocation7 + $0x78] sm:$0xff]
    %v176 = vld [vmem:[%s4] sm:$0x1]
    %v178 = vlaneseq
    %v179 = vshrl.u32 %v178, 7
    %v180 = vsub.s32 0, %v179
    %v181 = vrot.slane %v176, %v180
    %183 = vmatprep.subr.mxu0 0.0
    %184 = vmatpush1.msra.mxu0 %v160
    %185 = vmatprep.subr.mxu0 0.0
    %186 = vmatpush1.msra.mxu0 %v161
    %187 = vmatprep.subr.mxu0 0.0
    %188 = vmatpush1.msra.mxu0 %v162
    %189 = vmatprep.subr.mxu0 0.0
    %190 = vmatpush1.msra.mxu0 %v163
    %191 = vmatprep.subr.mxu0 0.0
    %192 = vmatpush1.msra.mxu0 %v164
    %193 = vmatprep.subr.mxu0 0.0
    %194 = vmatpush1.msra.mxu0 %v165
    %195 = vmatprep.subr.mxu0 0.0
    %196 = vmatpush1.msra.mxu0 %v166
    %197 = vmatprep.subr.mxu0 0.0
    %198 = vmatpush1.msra.mxu0 %v167
    %199 = vmatprep.subr.mxu0 0.0
    %200 = vmatpush1.msra.mxu0 %v168
    %201 = vmatprep.subr.mxu0 0.0
    %202 = vmatpush1.msra.mxu0 %v169
    %203 = vmatprep.subr.mxu0 0.0
    %204 = vmatpush1.msra.mxu0 %v170
    %205 = vmatprep.subr.mxu0 0.0
    %206 = vmatpush1.msra.mxu0 %v171
    %207 = vmatprep.subr.mxu0 0.0
    %208 = vmatpush1.msra.mxu0 %v172
    %209 = vmatprep.subr.mxu0 0.0
    %210 = vmatpush1.msra.mxu0 %v173
    %211 = vmatprep.subr.mxu0 0.0
    %212 = vmatpush1.msra.mxu0 %v174
    %213 = vmatprep.subr.mxu0 0.0
    %214 = vmatpush1.msra.mxu0 %v175
    %215 = vmatprep.subr.mxu0 0.0
    %216 = vmatpush1.msra.mxu0 0.0
    %217 = vmatprep.subr.mxu0 0.0
    %218 = vmatpush1.msra.mxu0 0.0
    %219 = vmatprep.subr.mxu0 0.0
    %220 = vmatpush1.msra.mxu0 0.0
    %221 = vmatprep.subr.mxu0 0.0
    %222 = vmatpush1.msra.mxu0 0.0
    %223 = vmatprep.subr.mxu0 0.0
    %224 = vmatpush1.msra.mxu0 0.0
    %225 = vmatprep.subr.mxu0 0.0
    %226 = vmatpush1.msra.mxu0 0.0
    %227 = vmatprep.subr.mxu0 0.0
    %228 = vmatpush1.msra.mxu0 0.0
    %229 = vmatprep.subr.mxu0 0.0
    %230 = vmatpush1.msra.mxu0 0.0
    %231 = vmatprep.subr.mxu0 0.0
    %232 = vmatpush1.msra.mxu0 0.0
    %233 = vmatprep.subr.mxu0 0.0
    %234 = vmatpush1.msra.mxu0 0.0
    %235 = vmatprep.subr.mxu0 0.0
    %236 = vmatpush1.msra.mxu0 0.0
    %237 = vmatprep.subr.mxu0 0.0
    %238 = vmatpush1.msra.mxu0 0.0
    %239 = vmatprep.subr.mxu0 0.0
    %240 = vmatpush1.msra.mxu0 0.0
    %241 = vmatprep.subr.mxu0 0.0
    %242 = vmatpush1.msra.mxu0 0.0
    %243 = vmatprep.subr.mxu0 0.0
    %244 = vmatpush1.msra.mxu0 0.0
    %245 = vmatprep.subr.mxu0 0.0
    %246 = vmatpush1.msra.mxu0 0.0
    %247 = vmatprep.mubr.f32.mxu0 0.0
    %248 = vmatmul.mubr.f32.gmra.mrb[0].mxu0 %v159
    %v249 = vpop.f32.mrb[0].mxu0
    %v250 = vadd.f32 %v181, %v249
    %v251 = vpop.f32.mrb[0].mxu0
    %252 = vdwg.mxu0
    %253 = vmax.xlane.f32.xlu0 %v250
    %v254 = vpop.xlane.xlu0 %253
    %v255 = vsub.f32 %v250, %v254
    %v256 = vmul.f32 %v255, 1.442695
    %v257 = vpow.pop %v256
    %258 = vadd.xlane.f32.xlu0 %v257
    %v259 = vpop.xlane.xlu0 %258
    %v260 = vlog2.pop %v259
    %v261 = vmul.f32 %v260, 0.6931472
    %v262 = vsub.f32 %v255, %v261
    %263 = vst [vmem:[#allocation8] sm:$0xff] %v262
    // Predicated region
    $region34: #{tpu_custom_call.1} parent=1 // pred_check
      _
    $region35: #{tpu_custom_call.1} parent=1 // pred_check_branch
      %265 = sbr.rel (0) target = $region37
    $region36: #{tpu_custom_call.1} parent=1 // pred_region
      %s267 = ssub.s32 128, 128
      %268 = vsyncadd [#allocation4], %s267
      %s270 = sshll.u32 [#allocation8], 4
      %s271 = int_to_ptr.vmem [resolvable:$true] %s270
      %273 = dma.vmem_to_hbm [thread:$0]  %s271, 128, %s5, [#allocation4]
    $region37: #{tpu_custom_call.1} parent=1 // pred_fallthru
      _
    // Predicated region
    $region38: #{tpu_custom_call.1} parent=1 // pred_check
      _
    $region39: #{tpu_custom_call.1} parent=1 // pred_check_branch
      %275 = sbr.rel (0) target = $region41
    $region40: #{tpu_custom_call.1} parent=1 // pred_region
      %276 = dma.done [#allocation4], 128
    $region41: #{tpu_custom_call.1} parent=1 // pred_fallthru
      _
    %277 = vsyncpa [#allocation3], 1
    %278 = vsyncpa [#allocation6], 1
    %279 = vsyncpa [#allocation4], 1

</llo_original>
